<compile_context>
chip_gen: v6e
topology: v6e:2x2x1
jax: 0.10.0
libtpu: 0.0.40
codegen_flags: <defaults>
</compile_context>

<pallas_src>
import jax
import jax.numpy as jnp
import numpy as np
from jax.experimental import pallas as pl
from jax.experimental.pallas import tpu as pltpu

_LANE = 128
_SUBLANE = 8


def _make_tv_kernel(TB, ACC, HW, W, BC, NB, has_tail):
    W_LEN = HW - 1   # width of the horizontal-diff accumulator
    H_LEN = HW - W   # width of the vertical-diff accumulator

    def _reduce_rows(dsq, width):
        # Collapse the TB row axis down to ACC rows with pure VPU adds.
        # (Splitting the leading axis at a multiple of 8 never crosses an
        # (8,128) tile boundary, so the reshape is layout-preserving.)
        if TB == ACC:
            return dsq
        return dsq.reshape(TB // ACC, ACC, width).sum(axis=0)

    def kernel(wmask_ref, x_ref, h_ref, w_ref, hacc_ref, wacc_ref):
        j = pl.program_id(0)

        @pl.when(j == 0)
        def _init():
            hacc_ref[...] = jnp.zeros_like(hacc_ref)
            wacc_ref[...] = jnp.zeros_like(wacc_ref)

        def _step(mask_rows):
            # Shifted views loaded straight from the ref.  On the flattened
            # H*W axis:
            #   dw[i] = x[i+1] - x[i]   (row-crossing i masked in epilogue)
            #   dh[i] = x[i+W] - x[i]   (always valid, i < (H-1)*W)
            # Diffs stay in the input dtype (halves VMEM traffic for bf16 on
            # v6e/v7x); only squares are accumulated in f32.
            # TODO(synk): on v5e (no bf16 VALU) cast to f32 before the sub.
            dw = (x_ref[:, pl.ds(1, W_LEN)]
                  - x_ref[:, pl.ds(0, W_LEN)]).astype(jnp.float32)
            dh = (x_ref[:, pl.ds(W, H_LEN)]
                  - x_ref[:, pl.ds(0, H_LEN)]).astype(jnp.float32)
            dsq_w = dw * dw
            dsq_h = dh * dh
            if mask_rows:
                # Zero contributions of slab rows past B*C (tail block only).
                row = j * TB + jax.lax.broadcasted_iota(jnp.int32, (TB, 1), 0)
                ok = row < BC
                dsq_w = jnp.where(ok, dsq_w, 0.0)
                dsq_h = jnp.where(ok, dsq_h, 0.0)
            wacc_ref[...] += _reduce_rows(dsq_w, W_LEN)
            hacc_ref[...] += _reduce_rows(dsq_h, H_LEN)

        if has_tail:
            is_tail = (j + 1) * TB > BC

            @pl.when(jnp.logical_not(is_tail))
            def _full_block():
                _step(mask_rows=False)

            @pl.when(is_tail)
            def _tail_block():
                _step(mask_rows=True)
        else:
            _step(mask_rows=False)

        # Single cross-lane/sublane reduce, once, in the epilogue.
        @pl.when(j == NB - 1)
        def _finalize():
            h_ref[...] = jnp.sum(hacc_ref[...]).reshape(1, 1)
            w_ref[...] = jnp.sum(wacc_ref[...] * wmask_ref[...]).reshape(1, 1)

    return kernel


def _tv_loss_jnp(x, tv_loss_weight):
    B, C, H, W = x.shape
    count_h = C * (H - 1) * W
    count_w = C * H * (W - 1)
    xf = x.astype(jnp.float32)
    h_tv = jnp.sum(jnp.square(xf[:, :, 1:, :] - xf[:, :, :H - 1, :]))
    w_tv = jnp.sum(jnp.square(xf[:, :, :, 1:] - xf[:, :, :, :W - 1]))
    return tv_loss_weight * 2.0 * (h_tv / count_h + w_tv / count_w) / B


def tv_loss(x, tv_loss_weight=1.0):
    """Exact reproduction of TVLoss.forward for NCHW input x."""
    B, C, H, W = x.shape
    count_h = C * (H - 1) * W
    count_w = C * H * (W - 1)

    BC = B * C
    HW = H * W
    itemsize = jnp.dtype(x.dtype).itemsize
    hw_pad = pl.cdiv(HW, _LANE) * _LANE
    row_bytes = hw_pad * itemsize           # padded VMEM bytes per slab
    min_rows = BC if BC < _SUBLANE else _SUBLANE

    # Degenerate spatial dims, or slabs too large for a sublane-aligned VMEM
    # block: fall back to plain XLA (itself memory-bound and fused).
    # TODO(synk): halo-tiled H path so huge single slabs stay in Pallas.
    if H < 2 or W < 2 or min_rows * row_bytes > 8 * 1024 * 1024:
        return _tv_loss_jnp(x, tv_loss_weight)

    x2 = x.reshape(BC, HW)                  # lane-dense view (free reshape)

    # ~4 MiB of *padded* input per grid step (HBM-streaming reduction with
    # ~0.35 us/step overhead); double-buffered it stays well under the 48 MiB
    # scoped-VMEM limit on every chip generation.
    target_block_bytes = 4 * 1024 * 1024
    if BC < _SUBLANE:
        TB = BC
    else:
        TB = max(_SUBLANE,
                 (target_block_bytes // row_bytes) // _SUBLANE * _SUBLANE)
        TB = min(TB, (BC // _SUBLANE) * _SUBLANE)
    ACC = TB if TB < _SUBLANE else _SUBLANE
    NB = pl.cdiv(BC, TB)
    has_tail = NB * TB != BC

    # 0/1 lane mask dropping row-crossing pairs of the flattened horizontal
    # diff (positions i with i % W == W-1); resident in VMEM, applied once.
    wmask_np = np.ones((H, W), np.float32)
    wmask_np[:, W - 1] = 0.0
    wmask = jnp.asarray(wmask_np.reshape(1, HW)[:, : HW - 1])

    kernel = _make_tv_kernel(TB, ACC, HW, W, BC, NB, has_tail)

    h_tv, w_tv = pl.pallas_call(
        kernel,
        out_shape=(
            jax.ShapeDtypeStruct((1, 1), jnp.float32),
            jax.ShapeDtypeStruct((1, 1), jnp.float32),
        ),
        grid_spec=pltpu.PrefetchScalarGridSpec(
            num_scalar_prefetch=0,
            grid=(NB,),
            in_specs=[
                pl.BlockSpec((1, HW - 1), lambda j: (0, 0)),    # lane mask
                pl.BlockSpec((TB, HW), lambda j: (j, 0)),       # input blocks
            ],
            out_specs=[
                pl.BlockSpec((1, 1), lambda j: (0, 0)),
                pl.BlockSpec((1, 1), lambda j: (0, 0)),
            ],
            scratch_shapes=[
                pltpu.VMEM((ACC, HW - W), jnp.float32),   # vertical partials
                pltpu.VMEM((ACC, HW - 1), jnp.float32),   # horizontal partials
            ],
        ),
        compiler_params=pltpu.CompilerParams(
            dimension_semantics=("arbitrary",),
            vmem_limit_bytes=48 * 1024 * 1024,
        ),
    )(wmask, x2)

    h_tv = h_tv[0, 0]
    w_tv = w_tv[0, 0]
    return tv_loss_weight * 2.0 * (h_tv / count_h + w_tv / count_w) / B


def tv_loss_ref(x, tv_loss_weight=1.0):
    B, C, H, W = x.shape
    count_h = C * (H - 1) * W
    count_w = C * H * (W - 1)
    h_tv = jnp.sum((x[:, :, 1:, :] - x[:, :, :H - 1, :]) ** 2)
    w_tv = jnp.sum((x[:, :, :, 1:] - x[:, :, :, :W - 1]) ** 2)
    return tv_loss_weight * 2.0 * (h_tv / count_h + w_tv / count_w) / B


if __name__ == "__main__":
    def check(shape, weight, seed):
        x = jax.random.normal(jax.random.PRNGKey(seed), shape,
                              dtype=jnp.float32)
        out = jax.block_until_ready(tv_loss(x, tv_loss_weight=weight))
        ref = tv_loss_ref(x, tv_loss_weight=weight)
        assert jnp.allclose(out, ref, rtol=1e-5, atol=1e-5), (shape, out, ref)

    # Base case: BC=8, HW=256 (single 8-row block, HW multiple of 128).
    check((2, 4, 16, 16), 1.0, 0)
    # Tail-masked path: BC=15 -> 2 blocks, last block has one garbage row.
    check((3, 5, 32, 32), 0.5, 1)
    # Multi-sub-block per-step reduce: BC=32 -> TB=32, ACC=8.
    check((4, 8, 16, 16), 1.0, 2)
    # Small BC (<8), non-power-of-two W, HW not a multiple of 128.
    check((2, 3, 20, 24), 2.0, 3)

    print("KERNEL_OK")
</pallas_src>

<mosaic_0001>
module attributes {stable_mosaic.version = 11 : i64} {
  func.func @kernel(%arg0: i32, %arg1: memref<1x255xf32, #tpu.memory_space<vmem>>, %arg2: memref<8x256xf32, #tpu.memory_space<vmem>>, %arg3: memref<1x1xf32, #tpu.memory_space<vmem>>, %arg4: memref<1x1xf32, #tpu.memory_space<vmem>>, %arg5: memref<8x240xf32, #tpu.memory_space<vmem>>, %arg6: memref<8x255xf32, #tpu.memory_space<vmem>>) attributes {dimension_semantics = [#tpu.dimension_semantics<arbitrary>], iteration_bounds = array<i64: 1>, scalar_prefetch = 0 : i64, scratch_operands = 2 : i64, tpu.core_type = #tpu.core_type<tc>, window_params = [{pipeline_mode = #tpu.pipeline_mode<synchronous>, transform_indices = @transform_0, window_bounds = array<i64: 1, 255>}, {transform_indices = @transform_1, window_bounds = array<i64: 8, 256>}, {pipeline_mode = #tpu.pipeline_mode<synchronous>, transform_indices = @transform_2, window_bounds = array<i64: 1, 1>}, {pipeline_mode = #tpu.pipeline_mode<synchronous>, transform_indices = @transform_3, window_bounds = array<i64: 1, 1>}]} {
    %c0_i32 = arith.constant 0 : i32
    %0 = arith.cmpi eq, %arg0, %c0_i32 : i32
    %1 = arith.extui %0 : i1 to i32
    %c0_i32_0 = arith.constant 0 : i32
    %2 = arith.cmpi ne, %1, %c0_i32_0 : i32
    scf.if %2 {
      %cst = arith.constant 0.000000e+00 : f32
      %20 = vector.broadcast %cst : f32 to vector<8x240xf32>
      %c0_16 = arith.constant 0 : index
      %c0_17 = arith.constant 0 : index
      %21 = vector.load %arg5[%c0_16, %c0_17] : memref<8x240xf32, #tpu.memory_space<vmem>>, vector<8x240xf32>
      tpu.vector_store %arg5[%c0_16, %c0_17], %20 {strides = array<i32>} : memref<8x240xf32, #tpu.memory_space<vmem>>, vector<8x240xf32>,
      %cst_18 = arith.constant 0.000000e+00 : f32
      %22 = vector.broadcast %cst_18 : f32 to vector<8x255xf32>
      %c0_19 = arith.constant 0 : index
      %c0_20 = arith.constant 0 : index
      %23 = vector.load %arg6[%c0_19, %c0_20] : memref<8x255xf32, #tpu.memory_space<vmem>>, vector<8x255xf32>
      tpu.vector_store %arg6[%c0_19, %c0_20], %22 {strides = array<i32>} : memref<8x255xf32, #tpu.memory_space<vmem>>, vector<8x255xf32>,
    } else {
    }
    %c0 = arith.constant 0 : index
    %c1 = arith.constant 1 : index
    %3 = vector.load %arg2[%c0, %c1] : memref<8x256xf32, #tpu.memory_space<vmem>>, vector<8x255xf32>
    %c0_1 = arith.constant 0 : index
    %c0_2 = arith.constant 0 : index
    %4 = vector.load %arg2[%c0_1, %c0_2] : memref<8x256xf32, #tpu.memory_space<vmem>>, vector<8x255xf32>
    %5 = arith.subf %3, %4 : vector<8x255xf32>
    %c0_3 = arith.constant 0 : index
    %c16 = arith.constant 16 : index
    %6 = vector.load %arg2[%c0_3, %c16] : memref<8x256xf32, #tpu.memory_space<vmem>>, vector<8x240xf32>
    %c0_4 = arith.constant 0 : index
    %c0_5 = arith.constant 0 : index
    %7 = vector.load %arg2[%c0_4, %c0_5] : memref<8x256xf32, #tpu.memory_space<vmem>>, vector<8x240xf32>
    %8 = arith.subf %6, %7 : vector<8x240xf32>
    %9 = arith.mulf %5, %5 : vector<8x255xf32>
    %10 = arith.mulf %8, %8 : vector<8x240xf32>
    %c0_6 = arith.constant 0 : index
    %c0_7 = arith.constant 0 : index
    %11 = vector.load %arg6[%c0_6, %c0_7] : memref<8x255xf32, #tpu.memory_space<vmem>>, vector<8x255xf32>
    %12 = arith.addf %11, %9 : vector<8x255xf32>
    %c0_8 = arith.constant 0 : index
    %c0_9 = arith.constant 0 : index
    %13 = vector.load %arg6[%c0_8, %c0_9] : memref<8x255xf32, #tpu.memory_space<vmem>>, vector<8x255xf32>
    tpu.vector_store %arg6[%c0_8, %c0_9], %12 {strides = array<i32>} : memref<8x255xf32, #tpu.memory_space<vmem>>, vector<8x255xf32>,
    %c0_10 = arith.constant 0 : index
    %c0_11 = arith.constant 0 : index
    %14 = vector.load %arg5[%c0_10, %c0_11] : memref<8x240xf32, #tpu.memory_space<vmem>>, vector<8x240xf32>
    %15 = arith.addf %14, %10 : vector<8x240xf32>
    %c0_12 = arith.constant 0 : index
    %c0_13 = arith.constant 0 : index
    %16 = vector.load %arg5[%c0_12, %c0_13] : memref<8x240xf32, #tpu.memory_space<vmem>>, vector<8x240xf32>
    tpu.vector_store %arg5[%c0_12, %c0_13], %15 {strides = array<i32>} : memref<8x240xf32, #tpu.memory_space<vmem>>, vector<8x240xf32>,
    %c0_i32_14 = arith.constant 0 : i32
    %17 = arith.cmpi eq, %arg0, %c0_i32_14 : i32
    %18 = arith.extui %17 : i1 to i32
    %c0_i32_15 = arith.constant 0 : i32
    %19 = arith.cmpi ne, %18, %c0_i32_15 : i32
    scf.if %19 {
      %c0_16 = arith.constant 0 : index
      %c0_17 = arith.constant 0 : index
      %20 = vector.load %arg5[%c0_16, %c0_17] : memref<8x240xf32, #tpu.memory_space<vmem>>, vector<8x240xf32>
      %21 = vector.shape_cast %20 : vector<8x240xf32> to vector<1x8x240xf32>
      %cst = arith.constant dense<0.000000e+00> : vector<1xf32>
      %22 = vector.multi_reduction <add>, %21, %cst [1, 2] : vector<1x8x240xf32> to vector<1xf32>
      %23 = vector.shape_cast %22 : vector<1xf32> to vector<1x1x1xf32>
      %24 = vector.extract %23[0, 0, 0] : f32 from vector<1x1x1xf32>
      %25 = vector.broadcast %24 : f32 to vector<1x1xf32>
      %c0_18 = arith.constant 0 : index
      %c0_19 = arith.constant 0 : index
      %26 = vector.load %arg3[%c0_18, %c0_19] : memref<1x1xf32, #tpu.memory_space<vmem>>, vector<1x1xf32>
      tpu.vector_store %arg3[%c0_18, %c0_19], %25 {strides = array<i32>} : memref<1x1xf32, #tpu.memory_space<vmem>>, vector<1x1xf32>,
      %c0_20 = arith.constant 0 : index
      %c0_21 = arith.constant 0 : index
      %27 = vector.load %arg6[%c0_20, %c0_21] : memref<8x255xf32, #tpu.memory_space<vmem>>, vector<8x255xf32>
      %c0_22 = arith.constant 0 : index
      %c0_23 = arith.constant 0 : index
      %28 = vector.load %arg1[%c0_22, %c0_23] : memref<1x255xf32, #tpu.memory_space<vmem>>, vector<1x255xf32>
      %29 = vector.broadcast %28 : vector<1x255xf32> to vector<8x255xf32>
      %30 = arith.mulf %27, %29 : vector<8x255xf32>
      %31 = vector.shape_cast %30 : vector<8x255xf32> to vector<1x8x255xf32>
      %cst_24 = arith.constant dense<0.000000e+00> : vector<1xf32>
      %32 = vector.multi_reduction <add>, %31, %cst_24 [1, 2] : vector<1x8x255xf32> to vector<1xf32>
      %33 = vector.shape_cast %32 : vector<1xf32> to vector<1x1x1xf32>
      %34 = vector.extract %33[0, 0, 0] : f32 from vector<1x1x1xf32>
      %35 = vector.broadcast %34 : f32 to vector<1x1xf32>
      %c0_25 = arith.constant 0 : index
      %c0_26 = arith.constant 0 : index
      %36 = vector.load %arg4[%c0_25, %c0_26] : memref<1x1xf32, #tpu.memory_space<vmem>>, vector<1x1xf32>
      tpu.vector_store %arg4[%c0_25, %c0_26], %35 {strides = array<i32>} : memref<1x1xf32, #tpu.memory_space<vmem>>, vector<1x1xf32>,
    } else {
    }
    return
  }
  func.func @transform_0(%arg0: i32) -> (i32, i32) {
    %c0_i32 = arith.constant 0 : i32
    %c0_i32_0 = arith.constant 0 : i32
    %c0_i32_1 = arith.constant 0 : i32
    return %c0_i32, %c0_i32_0 : i32, i32
  }
  func.func @transform_1(%arg0: i32) -> (i32, i32) {
    %c0_i32 = arith.constant 0 : i32
    %c0_i32_0 = arith.constant 0 : i32
    return %arg0, %c0_i32 : i32, i32
  }
  func.func @transform_2(%arg0: i32) -> (i32, i32) {
    %c0_i32 = arith.constant 0 : i32
    %c0_i32_0 = arith.constant 0 : i32
    %c0_i32_1 = arith.constant 0 : i32
    return %c0_i32, %c0_i32_0 : i32, i32
  }
  func.func @transform_3(%arg0: i32) -> (i32, i32) {
    %c0_i32 = arith.constant 0 : i32
    %c0_i32_0 = arith.constant 0 : i32
    %c0_i32_1 = arith.constant 0 : i32
    return %c0_i32, %c0_i32_0 : i32, i32
  }
}

</mosaic_0001>

<llo_original>
// kernel: tpu_custom_call.1
$region0: #{tpu_custom_call.1}
  #allocation0 [shape = 'u32[]', space=smem, size = 0x4, offset = 0x4, fixed_abs, tag = 'smem constant byte address 0x4 - core index']
  #allocation1 [shape = 'u32[144,128]{1,0:T(1,128)}', space=vmem, size = 0x12000, scoped, tag = 'internal scratch']
  #allocation2 [shape = 'f32[8,240]{1,0:T(8,128)}', space=vmem, size = 0x2000, scoped, tag = 'scratch operand']
  #allocation3 [shape = 'f32[8,255]{1,0:T(8,128)}', space=vmem, size = 0x2000, scoped, tag = 'scratch operand']
  %s0 = inlined_call_operand.hbm [shape: f32[1,255], index: 0, kind: input, shape index: {}]
  %s1 = inlined_call_operand.hbm [shape: f32[8,256], index: 1, kind: input, shape index: {}]
  %s2 = inlined_call_operand.hbm [shape: f32[1,1], index: 2, kind: output, shape index: {0}]
  %s3 = inlined_call_operand.hbm [shape: f32[1,1], index: 3, kind: output, shape index: {1}]
  %4 = xla_tuple %s2, %s3
  %s5 = sld [smem:[#allocation0]]
  $region42: #{tpu_custom_call.1} parent=0
    _
  %s7 = ssub.s32 1, %s5
  %s8 = scalar_select 0, %s7, %s5
  $region1: #{tpu_custom_call.1} parent=0
    #allocation4 [shape = 'u8[1024]{0}', space=vmem, size = 0x400, scoped, tag = 'input window, operand 0, single buffered']
    #allocation5 [shape = 's32[1]{0}', space=sflag, size = 0x4, scoped, tag = 'scoped memory for tpu_custom_call.1']
    #allocation6 [shape = 's32[1]{0}', space=sflag, size = 0x4, scoped, tag = 'scoped memory for tpu_custom_call.1']
    #allocation7 [shape = 'u8[8192]{0}', space=vmem, size = 0x2000, scoped, tag = 'input window, operand 1, single buffered']
    #allocation8 [shape = 's32[1]{0}', space=sflag, size = 0x4, scoped, tag = 'scoped memory for tpu_custom_call.1']
    #allocation9 [shape = 'u8[512]{0}', space=vmem, size = 0x400, scoped, tag = 'output window, operand 0, single buffered']
    #allocation10 [shape = 'u8[512]{0}', space=vmem, size = 0x400, scoped, tag = 'output window, operand 1, single buffered']
    #allocation11 [shape = 's32[1]{0}', space=sflag, size = 0x4, scoped, tag = 'scoped memory for tpu_custom_call.1']
    %9 = vsyncpa [#allocation5], 0
    %10 = vsyncpa [#allocation8], 0
    %11 = vsyncpa [#allocation6], 0
    %12 = vsyncpa [#allocation11], 0
    // Predicated region
    $region2: #{tpu_custom_call.1} parent=1 // pred_check
      _
    $region3: #{tpu_custom_call.1} parent=1 // pred_check_branch
      %14 = sbr.rel (0) target = $region5
    $region4: #{tpu_custom_call.1} parent=1 // pred_region
      %s16 = ssub.s32 32, 32
      %17 = vsyncadd [#allocation5], %s16
      %s19 = sshll.u32 [#allocation4], 4
      %s20 = int_to_ptr.vmem [resolvable:$true] %s19
      %22 = dma.hbm_to_vmem [thread:$0]  %s0, 32, %s20, [#allocation5]
    $region5: #{tpu_custom_call.1} parent=1 // pred_fallthru
      _
    // Predicated region
    $region6: #{tpu_custom_call.1} parent=1 // pred_check
      _
    $region7: #{tpu_custom_call.1} parent=1 // pred_check_branch
      %24 = sbr.rel (0) target = $region9
    $region8: #{tpu_custom_call.1} parent=1 // pred_region
      %s26 = ssub.s32 256, 256
      %27 = vsyncadd [#allocation8], %s26
      %s29 = sshll.u32 [#allocation7], 4
      %s30 = int_to_ptr.vmem [resolvable:$true] %s29
      %32 = dma.hbm_to_vmem [thread:$0]  %s1, 256, %s30, [#allocation8]
    $region9: #{tpu_custom_call.1} parent=1 // pred_fallthru
      _
    // Predicated region
    $region10: #{tpu_custom_call.1} parent=1 // pred_check
      _
    $region11: #{tpu_custom_call.1} parent=1 // pred_check_branch
      %34 = sbr.rel (0) target = $region13
    $region12: #{tpu_custom_call.1} parent=1 // pred_region
      %35 = dma.done [#allocation5], 32
    $region13: #{tpu_custom_call.1} parent=1 // pred_fallthru
      _
    // Predicated region
    $region14: #{tpu_custom_call.1} parent=1 // pred_check
      _
    $region15: #{tpu_custom_call.1} parent=1 // pred_check_branch
      %37 = sbr.rel (0) target = $region17
    $region16: #{tpu_custom_call.1} parent=1 // pred_region
      %38 = dma.done [#allocation8], 256
    $region17: #{tpu_custom_call.1} parent=1 // pred_fallthru
      _
    %p39 = scmp.eq.s32.totalorder 0, 0
    // Predicated region
    $region18: #{tpu_custom_call.1} parent=1 // pred_check
      %p40 = pneg %p39
    $region19: #{tpu_custom_call.1} parent=1 // pred_check_branch
      %42 = sbr.rel (%p40) target = $region21
    $region20: #{tpu_custom_call.1} parent=1 // pred_region
      %43 = vst [vmem:[#allocation2] sm:$0xff] 0.0
      %vm44 = vcmask 916480
      %45 = vst.msk [vmem:[#allocation2 + $0x8] sm:$0xff] %vm44, 0.0
      %46 = vst [vmem:[#allocation3] sm:$0xff] 0.0
      %vm47 = vcmask 1039360
      %48 = vst.msk [vmem:[#allocation3 + $0x8] sm:$0xff] %vm47, 0.0
    $region21: #{tpu_custom_call.1} parent=1 // pred_fallthru
      _
    %v49 = vld [vmem:[#allocation7] sm:$0xff]
    %v50 = vld [vmem:[#allocation7 + $0x8] sm:$0xff]
    %53 = vrot.lane.b32.xlu0 %v49, 1
    %v54 = vpop.permute.xlu0 %53
    %55 = vrot.lane.b32.xlu0 %v50, 1
    %v56 = vpop.permute.xlu0 %55
    %vm57 = vcmask 7168
    %v58 = vsel %vm57, %v54, %v56
    %v61 = vsub.f32 %v49, %v54
    %v62 = vsub.f32 %v50, %v58
    %63 = vrot.lane.b32.xlu0 %v49, 16
    %v64 = vpop.permute.xlu0 %63
    %65 = vrot.lane.b32.xlu0 %v50, 16
    %v66 = vpop.permute.xlu0 %65
    %vm67 = vcmask 130048
    %v68 = vsel %vm67, %v64, %v66
    %v71 = vsub.f32 %v49, %v64
    %v72 = vsub.f32 %v50, %v68
    %v73 = vmul.f32 %v61, %v61
    %v74 = vmul.f32 %v62, %v62
    %v75 = vmul.f32 %v71, %v71
    %v76 = vmul.f32 %v72, %v72
    %v77 = vld [vmem:[#allocation3] sm:$0xff]
    %v78 = vld [vmem:[#allocation3 + $0x8] sm:$0xff]
    %81 = vrot.lane.b32.xlu0 %v73, 127
    %v82 = vpop.permute.xlu0 %81
    %83 = vrot.lane.b32.xlu0 %v74, 127
    %v84 = vpop.permute.xlu0 %83
    %vm85 = vcmask 1039360
    %v86 = vsel %vm85, %v82, %v84
    %v89 = vadd.f32 %v77, %v86
    %v90 = vadd.f32 %v78, %v84
    %91 = vst [vmem:[#allocation3] sm:$0xff] %v89
    %92 = vst.msk [vmem:[#allocation3 + $0x8] sm:$0xff] %vm85, %v90
    %v93 = vld [vmem:[#allocation2] sm:$0xff]
    %v94 = vld [vmem:[#allocation2 + $0x8] sm:$0xff]
    %97 = vrot.lane.b32.xlu0 %v75, 112
    %v98 = vpop.permute.xlu0 %97
    %99 = vrot.lane.b32.xlu0 %v76, 112
    %v100 = vpop.permute.xlu0 %99
    %vm101 = vcmask 916480
    %v102 = vsel %vm101, %v98, %v100
    %v105 = vadd.f32 %v93, %v102
    %v106 = vadd.f32 %v94, %v100
    %107 = vst [vmem:[#allocation2] sm:$0xff] %v105
    %108 = vst.msk [vmem:[#allocation2 + $0x8] sm:$0xff] %vm101, %v106
    // Predicated region
    $region22: #{tpu_custom_call.1} parent=1 // pred_check
      %p109 = pneg %p39
    $region23: #{tpu_custom_call.1} parent=1 // pred_check_branch
      %111 = sbr.rel (%p109) target = $region25
    $region24: #{tpu_custom_call.1} parent=1 // pred_region
      %v112 = vld [vmem:[#allocation2] sm:$0xff]
      %v113 = vld [vmem:[#allocation2 + $0x8] sm:$0xff]
      %v114 = vsel %vm101, %v113, 0.0
      %v115 = vadd.f32 %v112, %v114
      %116 = vadd.xlane.f32.xlu0 %v115
      %v117 = vpop.xlane.xlu0 %116
      %v118 = vrot.slane %v117, 4
      %v119 = vadd.f32 %v117, %v118
      %v120 = vrot.slane %v119, 2
      %v121 = vadd.f32 %v119, %v120
      %v122 = vrot.slane %v121, 1
      %v123 = vadd.f32 %v121, %v122
      %s124 = vtos %v123
      %v125 = vstv %s124
      %vm126 = vcmask 0
      %127 = vst.msk [vmem:[#allocation9] sm:$0x1] %vm126, %v125
      %v128 = vld [vmem:[#allocation3] sm:$0xff]
      %v129 = vld [vmem:[#allocation3 + $0x8] sm:$0xff]
      %v130 = vld [vmem:[#allocation4] sm:$0x3]
      %v132 = vlaneseq
      %v133 = vshrl.u32 %v132, 7
      %v134 = vsub.s32 0, %v133
      %v135 = vrot.slane %v130, %v134
      %v136 = vlaneseq
      %v137 = vshrl.u32 %v136, 7
      %v138 = vsub.s32 1, %v137
      %v139 = vrot.slane %v130, %v138
      %v142 = vmul.f32 %v128, %v135
      %v143 = vmul.f32 %v129, %v139
      %v144 = vsel %vm85, %v143, 0.0
      %v145 = vadd.f32 %v142, %v144
      %146 = vadd.xlane.f32.xlu0 %v145
      %v147 = vpop.xlane.xlu0 %146
      %v148 = vrot.slane %v147, 4
      %v149 = vadd.f32 %v147, %v148
      %v150 = vrot.slane %v149, 2
      %v151 = vadd.f32 %v149, %v150
      %v152 = vrot.slane %v151, 1
      %v153 = vadd.f32 %v151, %v152
      %s154 = vtos %v153
      %v155 = vstv %s154
      %156 = vst.msk [vmem:[#allocation10] sm:$0x1] %vm126, %v155
    $region25: #{tpu_custom_call.1} parent=1 // pred_fallthru
      _
    // Predicated region
    $region26: #{tpu_custom_call.1} parent=1 // pred_check
      _
    $region27: #{tpu_custom_call.1} parent=1 // pred_check_branch
      %158 = sbr.rel (0) target = $region29
    $region28: #{tpu_custom_call.1} parent=1 // pred_region
      %s160 = ssub.s32 16, 16
      %161 = vsyncadd [#allocation6], %s160
      %s163 = sshll.u32 [#allocation9], 4
      %s164 = int_to_ptr.vmem [resolvable:$true] %s163
      %166 = dma.vmem_to_hbm [thread:$0]  %s164, 16, %s2, [#allocation6]
    $region29: #{tpu_custom_call.1} parent=1 // pred_fallthru
      _
    // Predicated region
    $region30: #{tpu_custom_call.1} parent=1 // pred_check
      _
    $region31: #{tpu_custom_call.1} parent=1 // pred_check_branch
      %168 = sbr.rel (0) target = $region33
    $region32: #{tpu_custom_call.1} parent=1 // pred_region
      %s170 = ssub.s32 16, 16
      %171 = vsyncadd [#allocation11], %s170
      %s173 = sshll.u32 [#allocation10], 4
      %s174 = int_to_ptr.vmem [resolvable:$true] %s173
      %176 = dma.vmem_to_hbm [thread:$0]  %s174, 16, %s3, [#allocation11]
    $region33: #{tpu_custom_call.1} parent=1 // pred_fallthru
      _
    // Predicated region
    $region34: #{tpu_custom_call.1} parent=1 // pred_check
      _
    $region35: #{tpu_custom_call.1} parent=1 // pred_check_branch
      %178 = sbr.rel (0) target = $region37
    $region36: #{tpu_custom_call.1} parent=1 // pred_region
      %179 = dma.done [#allocation6], 16
    $region37: #{tpu_custom_call.1} parent=1 // pred_fallthru
      _
    // Predicated region
    $region38: #{tpu_custom_call.1} parent=1 // pred_check
      _
    $region39: #{tpu_custom_call.1} parent=1 // pred_check_branch
      %181 = sbr.rel (0) target = $region41
    $region40: #{tpu_custom_call.1} parent=1 // pred_region
      %182 = dma.done [#allocation11], 16
    $region41: #{tpu_custom_call.1} parent=1 // pred_fallthru
      _
    %183 = vsyncpa [#allocation5], 1
    %184 = vsyncpa [#allocation8], 1
    %185 = vsyncpa [#allocation6], 1
    %186 = vsyncpa [#allocation11], 1

</llo_original>
